<compile_context>
chip_gen: v7x
topology: tpu7x:2x2x1
jax: 0.10.0
libtpu: 0.0.40
codegen_flags: <defaults>
</compile_context>

<pallas_src>
import jax
import jax.numpy as jnp
from jax.experimental import pallas as pl
from jax.experimental.pallas import tpu as pltpu


def _default_vmem_limit_bytes():
    """Scoped-VMEM budget per generation: 64 MiB on v5e/v6e (128 MiB physical),
    32 MiB on v7x (64 MiB physical, 32 MiB scoped default)."""
    try:
        cap = int(pltpu.get_tpu_info().vmem_capacity_bytes)
    except Exception:
        cap = 64 * 1024 * 1024          # conservative (v7x-safe) fallback
    return (64 if cap >= 100 * 1024 * 1024 else 32) * 1024 * 1024


def make_rtfm_loss_kernel(alpha, margin, normal_weight, abnormal_weight,
                          batch_tile=None, feature_buffers=None,
                          vmem_limit_bytes=None, cast_features_to_bf16=True):
    """Returns (score_normal, score_abnormal, nlabel, alabel, feat_n, feat_a)
    -> scalar loss, matching RTFM_loss.forward."""
    alpha = float(alpha)
    margin = float(margin)
    normal_weight = float(normal_weight)
    abnormal_weight = float(abnormal_weight)

    def rtfm_loss(score_normal, score_abnormal, nlabel, alabel, feat_n, feat_a):
        B, T, D = feat_n.shape
        assert feat_a.shape == (B, T, D)

        # ---- weighted-BCE classification term (tiny, O(B)) ----------------
        # Done once in plain JAX (fused by XLA) instead of per grid step.
        # weight == 1 everywhere when normal_weight == abnormal_weight == 1,
        # i.e. plain BCELoss -> same formula.  PyTorch clamps logs at -100.
        label = jnp.concatenate([jnp.reshape(nlabel, (-1,)),
                                 jnp.reshape(alabel, (-1,))], 0).astype(jnp.float32)
        score = jnp.concatenate([jnp.reshape(score_normal, (-1,)),
                                 jnp.reshape(score_abnormal, (-1,))], 0).astype(jnp.float32)
        weight = abnormal_weight * label + normal_weight * (1.0 - label)
        log_s = jnp.maximum(jnp.log(score), -100.0)
        log_1ms = jnp.maximum(jnp.log(1.0 - score), -100.0)
        loss_cls = jnp.mean(weight * -(label * log_s + (1.0 - label) * log_1ms))

        # ---- feature streaming setup ---------------------------------------
        # Narrow the HBM stream (the entire cost of this kernel) to bf16;
        # all accumulation inside the kernel stays f32.
        if cast_features_to_bf16 and feat_n.dtype == jnp.float32:
            feat_n = feat_n.astype(jnp.bfloat16)
            feat_a = feat_a.astype(jnp.bfloat16)
        stream_dtype = feat_n.dtype
        itemsize = jnp.dtype(stream_dtype).itemsize
        use_mxu_reduce = stream_dtype != jnp.float32   # bf16/f16 -> MXU reduce

        vmem_limit = int(vmem_limit_bytes or _default_vmem_limit_bytes())
        n_buffers = int(feature_buffers) if feature_buffers else 2
        if batch_tile is None:
            per_sample_bytes = T * D * itemsize
            budget = int(vmem_limit * 0.6)         # 2 features x n_buffers bufs
            tb = budget // max(1, 2 * n_buffers * per_sample_bytes)
            tb = int(max(1, min(B, tb)))
        else:
            tb = int(min(int(batch_tile), B))
        num_tiles = int(pl.cdiv(B, tb))

        def kernel(fn_ref, fa_ref, out_ref):
            i = pl.program_id(0)

            def mean_over_t(ref):
                x = ref[...]                              # (tb, T, D), native dtype
                if use_mxu_reduce:
                    # T-reduce on the idle MXU with f32 accumulation:
                    # never materializes an f32 copy of the tile, and keeps
                    # the VALU path free (v5e has no bf16 VALU).
                    ones = jnp.ones((tb, 1, T), dtype=stream_dtype)
                    s = jnp.einsum("bst,btd->bsd", ones, x,
                                   preferred_element_type=jnp.float32)
                else:
                    # f32 stream: native-precision reduce, no upcast needed.
                    s = jnp.sum(x, axis=1, keepdims=True)          # (tb, 1, D)
                return s * (1.0 / T)                               # (tb, 1, D) f32

            mean_n = mean_over_t(fn_ref)
            mean_a = mean_over_t(fa_ref)
            norm_n = jnp.sqrt(jnp.sum(mean_n * mean_n, axis=2))    # (tb, 1)
            norm_a = jnp.sqrt(jnp.sum(mean_a * mean_a, axis=2))    # (tb, 1)
            per_sample = (jnp.abs(margin - norm_a) + norm_n) ** 2  # (tb, 1)

            # Ragged last tile: rows past B hold unspecified data; discard with
            # a select (never a multiply, so NaN/Inf garbage cannot propagate).
            local = jax.lax.broadcasted_iota(jnp.int32, (tb, 1), 0)
            valid = (i * tb + local) < B
            rtfm_partial = jnp.sum(jnp.where(valid, per_sample,
                                             jnp.zeros_like(per_sample)))

            # Each grid step writes only its own lane-dense (8,128) block; no
            # block is revisited -> the batch axis is safe to mark "parallel".
            out_ref[0] = jnp.zeros((8, 128), jnp.float32) + rtfm_partial

        feat_spec_kwargs = {}
        if feature_buffers is not None and int(feature_buffers) != 2:
            # Deeper buffering (e.g. 3 on v7x) to hide DMA-start latency.
            feat_spec_kwargs["pipeline_mode"] = pl.Buffered(int(feature_buffers))

        feat_bytes = 2 * B * T * D * itemsize
        cost = pl.CostEstimate(
            flops=int(2 * B * T * D + 8 * B * D + 16 * B),
            transcendentals=int(2 * B),
            bytes_accessed=int(feat_bytes + num_tiles * 8 * 128 * 4),
        )

        partials = pl.pallas_call(
            kernel,
            out_shape=jax.ShapeDtypeStruct((num_tiles, 8, 128), jnp.float32),
            grid=(num_tiles,),
            in_specs=[
                pl.BlockSpec((tb, T, D), lambda i: (i, 0, 0), **feat_spec_kwargs),
                pl.BlockSpec((tb, T, D), lambda i: (i, 0, 0), **feat_spec_kwargs),
            ],
            out_specs=pl.BlockSpec((1, 8, 128), lambda i: (i, 0, 0)),
            compiler_params=pltpu.CompilerParams(
                # Independent batch tiles -> shardable across both v7x TCs
                # (a measured no-op on single-TC v5e/v6e).  If a v7x trace
                # shows a single TC, switch to pltpu.CORE_PARALLEL.
                dimension_semantics=("parallel",),
                vmem_limit_bytes=vmem_limit,
            ),
            cost_estimate=cost,
        )(feat_n, feat_a)

        # Tiny epilogue: finish the mean over B and combine with the BCE term.
        loss_rtfm = jnp.sum(partials[:, 0, 0]) / float(B)
        return loss_cls + alpha * loss_rtfm

    return rtfm_loss


def rtfm_loss_reference(alpha, margin, normal_weight, abnormal_weight,
                        score_normal, score_abnormal, nlabel, alabel,
                        feat_n, feat_a):
    """Pure-jnp reference mirroring the PyTorch module (all-f32 math)."""
    label = jnp.concatenate([nlabel.reshape(-1), alabel.reshape(-1)], 0).astype(jnp.float32)
    score = jnp.concatenate([score_normal.reshape(-1),
                             score_abnormal.reshape(-1)], 0).astype(jnp.float32)
    weight = abnormal_weight * label + normal_weight * (1 - label)
    log_s = jnp.maximum(jnp.log(score), -100.0)
    log_1ms = jnp.maximum(jnp.log(1.0 - score), -100.0)
    loss_cls = jnp.mean(weight * (-(label * log_s + (1 - label) * log_1ms)))
    feat_n = feat_n.astype(jnp.float32)
    feat_a = feat_a.astype(jnp.float32)
    loss_abn = jnp.abs(margin - jnp.linalg.norm(jnp.mean(feat_a, axis=1), axis=1))
    loss_nor = jnp.linalg.norm(jnp.mean(feat_n, axis=1), axis=1)
    loss_rtfm = jnp.mean((loss_abn + loss_nor) ** 2)
    return loss_cls + alpha * loss_rtfm


if __name__ == "__main__":
    # Module hyperparameters (deterministic, in-script).
    alpha = 0.0001
    margin = 100.0
    normal_weight = 1.0
    abnormal_weight = 2.0    # exercises the weighted-BCE branch

    keys = jax.random.split(jax.random.PRNGKey(0), 12)

    # ---- check 1: B=2, T=8, D=32, f32 inputs, default (bf16 HBM stream) ---
    B, T, D = 2, 8, 32
    score_normal = jax.nn.sigmoid(jax.random.normal(keys[0], (B, 1), jnp.float32))
    score_abnormal = jax.nn.sigmoid(jax.random.normal(keys[1], (B, 1), jnp.float32))
    nlabel = jnp.zeros((B,), jnp.float32)
    alabel = jnp.ones((B,), jnp.float32)
    feat_n = jax.random.normal(keys[2], (B, T, D), jnp.float32)
    feat_a = jax.random.normal(keys[3], (B, T, D), jnp.float32) * 3.0

    loss_fn = jax.jit(make_rtfm_loss_kernel(alpha, margin,
                                            normal_weight, abnormal_weight))
    loss = jax.block_until_ready(
        loss_fn(score_normal, score_abnormal, nlabel, alabel, feat_n, feat_a))
    # Exact check against a reference seeing the same bf16-quantized stream.
    ref_q = rtfm_loss_reference(alpha, margin, normal_weight, abnormal_weight,
                                score_normal, score_abnormal, nlabel, alabel,
                                feat_n.astype(jnp.bfloat16).astype(jnp.float32),
                                feat_a.astype(jnp.bfloat16).astype(jnp.float32))
    assert jnp.allclose(loss, ref_q, rtol=1e-5, atol=1e-5), (loss, ref_q)
    # Sanity check against the full-f32 reference (bf16 streaming tolerance).
    ref_f32 = rtfm_loss_reference(alpha, margin, normal_weight, abnormal_weight,
                                  score_normal, score_abnormal, nlabel, alabel,
                                  feat_n, feat_a)
    assert jnp.allclose(loss, ref_f32, rtol=2e-2, atol=2e-2), (loss, ref_f32)

    # ---- check 2: B=3 bf16 features, forced batch_tile=2 ------------------
    #      (multi-tile grid + ragged last tile + MXU bf16 reduce path)
    B2 = 3
    score_normal2 = jax.nn.sigmoid(jax.random.normal(keys[4], (B2, 1), jnp.float32))
    score_abnormal2 = jax.nn.sigmoid(jax.random.normal(keys[5], (B2, 1), jnp.float32))
    nlabel2 = jnp.zeros((B2,), jnp.float32)
    alabel2 = jnp.ones((B2,), jnp.float32)
    feat_n2 = jax.random.normal(keys[6], (B2, T, D), jnp.float32).astype(jnp.bfloat16)
    feat_a2 = (jax.random.normal(keys[7], (B2, T, D), jnp.float32) * 3.0).astype(jnp.bfloat16)

    loss_fn2 = jax.jit(make_rtfm_loss_kernel(alpha, margin, normal_weight,
                                             abnormal_weight, batch_tile=2))
    loss2 = jax.block_until_ready(
        loss_fn2(score_normal2, score_abnormal2, nlabel2, alabel2, feat_n2, feat_a2))
    ref2 = rtfm_loss_reference(alpha, margin, normal_weight, abnormal_weight,
                               score_normal2, score_abnormal2, nlabel2, alabel2,
                               feat_n2.astype(jnp.float32), feat_a2.astype(jnp.float32))
    assert jnp.allclose(loss2, ref2, rtol=1e-4, atol=1e-4), (loss2, ref2)

    # ---- check 3: B=4 f32 features, bf16 cast disabled, batch_tile=2 ------
    #      (native-f32 streaming path: plain f32 reduce, exact vs reference)
    B3 = 4
    score_normal3 = jax.nn.sigmoid(jax.random.normal(keys[8], (B3, 1), jnp.float32))
    score_abnormal3 = jax.nn.sigmoid(jax.random.normal(keys[9], (B3, 1), jnp.float32))
    nlabel3 = jnp.zeros((B3,), jnp.float32)
    alabel3 = jnp.ones((B3,), jnp.float32)
    feat_n3 = jax.random.normal(keys[10], (B3, T, D), jnp.float32)
    feat_a3 = jax.random.normal(keys[11], (B3, T, D), jnp.float32) * 3.0

    loss_fn3 = jax.jit(make_rtfm_loss_kernel(alpha, margin, normal_weight,
                                             abnormal_weight, batch_tile=2,
                                             cast_features_to_bf16=False))
    loss3 = jax.block_until_ready(
        loss_fn3(score_normal3, score_abnormal3, nlabel3, alabel3, feat_n3, feat_a3))
    ref3 = rtfm_loss_reference(alpha, margin, normal_weight, abnormal_weight,
                               score_normal3, score_abnormal3, nlabel3, alabel3,
                               feat_n3, feat_a3)
    assert jnp.allclose(loss3, ref3, rtol=1e-4, atol=1e-4), (loss3, ref3)

    print("KERNEL_OK")
</pallas_src>

<mosaic_0001>
module attributes {stable_mosaic.version = 11 : i64} {
  func.func @kernel(%arg0: i32, %arg1: memref<2x8x32xbf16, #tpu.memory_space<vmem>>, %arg2: memref<2x8x32xbf16, #tpu.memory_space<vmem>>, %arg3: memref<1x8x128xf32, #tpu.memory_space<vmem>>) attributes {dimension_semantics = [#tpu.dimension_semantics<parallel>], iteration_bounds = array<i64: 1>, scalar_prefetch = 0 : i64, scratch_operands = 0 : i64, tpu.core_type = #tpu.core_type<tc>, window_params = [{transform_indices = @transform_0, window_bounds = array<i64: 2, 8, 32>}, {transform_indices = @transform_1, window_bounds = array<i64: 2, 8, 32>}, {transform_indices = @transform_2, window_bounds = array<i64: 1, 8, 128>}]} {
    %c0 = arith.constant 0 : index
    %c0_0 = arith.constant 0 : index
    %c0_1 = arith.constant 0 : index
    %0 = vector.load %arg1[%c0, %c0_0, %c0_1] : memref<2x8x32xbf16, #tpu.memory_space<vmem>>, vector<2x8x32xbf16>
    %cst = arith.constant 1.000000e+00 : bf16
    %1 = vector.broadcast %cst : bf16 to vector<2x1x8xbf16>
    "tpu.trace_start"() <{level = 10 : i32, message = "bst,btd->bsd"}> : () -> ()
    %cst_2 = arith.constant dense<0.000000e+00> : vector<2x1x32xf32>
    %2 = tpu.matmul %1, %0, %cst_2 {dimension_numbers = #tpu.dot_dimension_numbers<[2], [1], [1], [2], [0, 0, 0, 1, 1, 2], [0], [0]>} : vector<2x1x8xbf16>, vector<2x8x32xbf16>, vector<2x1x32xf32> -> vector<2x1x32xf32>
    "tpu.trace_stop"() : () -> ()
    %cst_3 = arith.constant 1.250000e-01 : f32
    %3 = vector.broadcast %cst_3 : f32 to vector<2x1x32xf32>
    %4 = arith.mulf %2, %3 : vector<2x1x32xf32>
    %c0_4 = arith.constant 0 : index
    %c0_5 = arith.constant 0 : index
    %c0_6 = arith.constant 0 : index
    %5 = vector.load %arg2[%c0_4, %c0_5, %c0_6] : memref<2x8x32xbf16, #tpu.memory_space<vmem>>, vector<2x8x32xbf16>
    %cst_7 = arith.constant 1.000000e+00 : bf16
    %6 = vector.broadcast %cst_7 : bf16 to vector<2x1x8xbf16>
    "tpu.trace_start"() <{level = 10 : i32, message = "bst,btd->bsd"}> : () -> ()
    %cst_8 = arith.constant dense<0.000000e+00> : vector<2x1x32xf32>
    %7 = tpu.matmul %6, %5, %cst_8 {dimension_numbers = #tpu.dot_dimension_numbers<[2], [1], [1], [2], [0, 0, 0, 1, 1, 2], [0], [0]>} : vector<2x1x8xbf16>, vector<2x8x32xbf16>, vector<2x1x32xf32> -> vector<2x1x32xf32>
    "tpu.trace_stop"() : () -> ()
    %cst_9 = arith.constant 1.250000e-01 : f32
    %8 = vector.broadcast %cst_9 : f32 to vector<2x1x32xf32>
    %9 = arith.mulf %7, %8 : vector<2x1x32xf32>
    %10 = arith.mulf %4, %4 : vector<2x1x32xf32>
    %cst_10 = arith.constant dense<0.000000e+00> : vector<2x1xf32>
    %11 = vector.multi_reduction <add>, %10, %cst_10 [2] : vector<2x1x32xf32> to vector<2x1xf32>
    %12 = math.sqrt %11 : vector<2x1xf32>
    %13 = arith.mulf %9, %9 : vector<2x1x32xf32>
    %cst_11 = arith.constant dense<0.000000e+00> : vector<2x1xf32>
    %14 = vector.multi_reduction <add>, %13, %cst_11 [2] : vector<2x1x32xf32> to vector<2x1xf32>
    %15 = math.sqrt %14 : vector<2x1xf32>
    %cst_12 = arith.constant 1.000000e+02 : f32
    %16 = vector.broadcast %cst_12 : f32 to vector<2x1xf32>
    %17 = arith.subf %16, %15 : vector<2x1xf32>
    %18 = math.absf %17 : vector<2x1xf32>
    %19 = arith.addf %18, %12 : vector<2x1xf32>
    %20 = arith.mulf %19, %19 : vector<2x1xf32>
    %21 = tpu.iota {dimensions = array<i32: 0>} : vector<2x1xi32>
    %c2_i32 = arith.constant 2 : i32
    %22 = arith.muli %arg0, %c2_i32 : i32
    %23 = vector.broadcast %22 : i32 to vector<2x1xi32>
    %24 = arith.addi %23, %21 : vector<2x1xi32>
    %c2_i32_13 = arith.constant 2 : i32
    %25 = vector.broadcast %c2_i32_13 : i32 to vector<2x1xi32>
    %26 = arith.cmpi slt, %24, %25 : vector<2x1xi32>
    %cst_14 = arith.constant 0.000000e+00 : f32
    %27 = vector.broadcast %cst_14 : f32 to vector<2x1xf32>
    %28 = arith.select %26, %20, %27 : vector<2x1xi1>, vector<2x1xf32>
    %29 = vector.shape_cast %28 : vector<2x1xf32> to vector<1x2x1xf32>
    %cst_15 = arith.constant dense<0.000000e+00> : vector<1xf32>
    %30 = vector.multi_reduction <add>, %29, %cst_15 [1, 2] : vector<1x2x1xf32> to vector<1xf32>
    %31 = vector.shape_cast %30 : vector<1xf32> to vector<1x1x1xf32>
    %32 = vector.extract %31[0, 0, 0] : f32 from vector<1x1x1xf32>
    %cst_16 = arith.constant 0.000000e+00 : f32
    %33 = vector.broadcast %cst_16 : f32 to vector<8x128xf32>
    %34 = vector.broadcast %32 : f32 to vector<8x128xf32>
    %35 = arith.addf %33, %34 : vector<8x128xf32>
    %c0_17 = arith.constant 0 : index
    %c0_18 = arith.constant 0 : index
    %c0_19 = arith.constant 0 : index
    %36 = vector.load %arg3[%c0_17, %c0_18, %c0_19] : memref<1x8x128xf32, #tpu.memory_space<vmem>>, vector<1x8x128xf32>
    %37 = vector.shape_cast %36 : vector<1x8x128xf32> to vector<8x128xf32>
    %38 = vector.shape_cast %35 : vector<8x128xf32> to vector<1x8x128xf32>
    tpu.vector_store %arg3[%c0_17, %c0_18, %c0_19], %38 {strides = array<i32>} : memref<1x8x128xf32, #tpu.memory_space<vmem>>, vector<1x8x128xf32>,
    return
  }
  func.func @transform_0(%arg0: i32) -> (i32, i32, i32) {
    %c0_i32 = arith.constant 0 : i32
    %c0_i32_0 = arith.constant 0 : i32
    %c0_i32_1 = arith.constant 0 : i32
    return %arg0, %c0_i32, %c0_i32_0 : i32, i32, i32
  }
  func.func @transform_1(%arg0: i32) -> (i32, i32, i32) {
    %c0_i32 = arith.constant 0 : i32
    %c0_i32_0 = arith.constant 0 : i32
    %c0_i32_1 = arith.constant 0 : i32
    return %arg0, %c0_i32, %c0_i32_0 : i32, i32, i32
  }
  func.func @transform_2(%arg0: i32) -> (i32, i32, i32) {
    %c0_i32 = arith.constant 0 : i32
    %c0_i32_0 = arith.constant 0 : i32
    %c0_i32_1 = arith.constant 0 : i32
    return %arg0, %c0_i32, %c0_i32_0 : i32, i32, i32
  }
}

</mosaic_0001>

<llo_original>
// kernel: rtfm_loss.1
$region0: #{rtfm_loss.1}
  #allocation0 [shape = 'u32[]', space=smem, size = 0x4, offset = 0x4, fixed_abs, tag = 'smem constant byte address 0x4 - core index']
  #allocation1 [shape = 'u32[144,128]{1,0:T(1,128)}', space=vmem, size = 0x12000, scoped, tag = 'internal scratch']
  %s0 = inlined_call_operand.vmem [shape: bf16[2,8,32], index: 0, kind: input, shape index: {}]
  %s1 = inlined_call_operand.vmem [shape: bf16[2,8,32], index: 1, kind: input, shape index: {}]
  %s2 = inlined_call_operand.vmem [shape: f32[1,8,128], index: 2, kind: output, shape index: {}]
  %s3 = sld [smem:[#allocation0]]
  $region18: #{rtfm_loss.1} parent=0
    _
  %s5 = ssub.s32 1, %s3
  %s6 = scalar_select 0, %s5, %s3
  // Predicated region
  $region2: #{rtfm_loss.1} parent=0 // pred_check
    _
  $region3: #{rtfm_loss.1} parent=0 // pred_check_branch
    %8 = sbr.rel (0) target = $region5
  $region4: #{rtfm_loss.1} parent=0 // pred_region
    _
  $region5: #{rtfm_loss.1} parent=0 // pred_fallthru
    _
  // Predicated region
  $region6: #{rtfm_loss.1} parent=0 // pred_check
    _
  $region7: #{rtfm_loss.1} parent=0 // pred_check_branch
    %10 = sbr.rel (0) target = $region9
  $region8: #{rtfm_loss.1} parent=0 // pred_region
    _
  $region9: #{rtfm_loss.1} parent=0 // pred_fallthru
    _
  %v13 = vld [vmem:[%s0] sm:$0xf]
  %v14 = vld [vmem:[%s0 + $0x4] sm:$0xf]
  %vm15 = vcmask 64512
  %v17 = vsel %vm15, 1065369472, 0
  %vm19 = vcmask 1043456
  %v21 = vsel %vm19, %v13, 0
  %23 = vmatprep.subr.bf16.mxu0 0
  %24 = vmatpush1.bf16.msra.mxu0 %v21
  %25 = vmatprep.subr.bf16.mxu0 0
  %26 = vmatpush1.bf16.msra.mxu0 0
  %27 = vmatprep.subr.bf16.mxu0 0
  %28 = vmatpush1.bf16.msra.mxu0 0
  %29 = vmatprep.subr.bf16.mxu0 0
  %30 = vmatpush1.bf16.msra.mxu0 0
  %31 = vmatprep.subr.bf16.mxu0 0
  %32 = vmatpush1.bf16.msra.mxu0 0
  %33 = vmatprep.subr.bf16.mxu0 0
  %34 = vmatpush1.bf16.msra.mxu0 0
  %35 = vmatprep.subr.bf16.mxu0 0
  %36 = vmatpush1.bf16.msra.mxu0 0
  %37 = vmatprep.subr.bf16.mxu0 0
  %38 = vmatpush1.bf16.msra.mxu0 0
  %39 = vmatprep.subr.bf16.mxu0 0
  %40 = vmatpush1.bf16.msra.mxu0 0
  %41 = vmatprep.subr.bf16.mxu0 0
  %42 = vmatpush1.bf16.msra.mxu0 0
  %43 = vmatprep.subr.bf16.mxu0 0
  %44 = vmatpush1.bf16.msra.mxu0 0
  %45 = vmatprep.subr.bf16.mxu0 0
  %46 = vmatpush1.bf16.msra.mxu0 0
  %47 = vmatprep.subr.bf16.mxu0 0
  %48 = vmatpush1.bf16.msra.mxu0 0
  %49 = vmatprep.subr.bf16.mxu0 0
  %50 = vmatpush1.bf16.msra.mxu0 0
  %51 = vmatprep.subr.bf16.mxu0 0
  %52 = vmatpush1.bf16.msra.mxu0 0
  %53 = vmatprep.subr.bf16.mxu0 0
  %54 = vmatpush1.bf16.msra.mxu0 0
  %55 = vmatprep.mubr.bf16.mxu0 0
  %56 = vmatmul.mubr.bf16.gmra.mrb[0].mxu0 %v17
  %v57 = vpop.f32.mrb[0].mxu0
  %v58 = vadd.f32 0.0, %v57
  %v59 = vpop.f32.mrb[0].mxu0
  %v60 = vpop.f32.mrb[0].mxu0
  %v61 = vpop.f32.mrb[0].mxu0
  %62 = vdwg.mxu0
  %v64 = vsel %vm19, %v14, 0
  %66 = vmatprep.subr.bf16.mxu0 0
  %67 = vmatpush1.bf16.msra.mxu0 %v64
  %68 = vmatprep.subr.bf16.mxu0 0
  %69 = vmatpush1.bf16.msra.mxu0 0
  %70 = vmatprep.subr.bf16.mxu0 0
  %71 = vmatpush1.bf16.msra.mxu0 0
  %72 = vmatprep.subr.bf16.mxu0 0
  %73 = vmatpush1.bf16.msra.mxu0 0
  %74 = vmatprep.subr.bf16.mxu0 0
  %75 = vmatpush1.bf16.msra.mxu0 0
  %76 = vmatprep.subr.bf16.mxu0 0
  %77 = vmatpush1.bf16.msra.mxu0 0
  %78 = vmatprep.subr.bf16.mxu0 0
  %79 = vmatpush1.bf16.msra.mxu0 0
  %80 = vmatprep.subr.bf16.mxu0 0
  %81 = vmatpush1.bf16.msra.mxu0 0
  %82 = vmatprep.subr.bf16.mxu0 0
  %83 = vmatpush1.bf16.msra.mxu0 0
  %84 = vmatprep.subr.bf16.mxu0 0
  %85 = vmatpush1.bf16.msra.mxu0 0
  %86 = vmatprep.subr.bf16.mxu0 0
  %87 = vmatpush1.bf16.msra.mxu0 0
  %88 = vmatprep.subr.bf16.mxu0 0
  %89 = vmatpush1.bf16.msra.mxu0 0
  %90 = vmatprep.subr.bf16.mxu0 0
  %91 = vmatpush1.bf16.msra.mxu0 0
  %92 = vmatprep.subr.bf16.mxu0 0
  %93 = vmatpush1.bf16.msra.mxu0 0
  %94 = vmatprep.subr.bf16.mxu0 0
  %95 = vmatpush1.bf16.msra.mxu0 0
  %96 = vmatprep.subr.bf16.mxu0 0
  %97 = vmatpush1.bf16.msra.mxu0 0
  %98 = vmatprep.mubr.bf16.mxu0 0
  %99 = vmatmul.mubr.bf16.gmra.mrb[0].mxu0 %v17
  %v100 = vpop.f32.mrb[0].mxu0
  %v101 = vadd.f32 0.0, %v100
  %v102 = vpop.f32.mrb[0].mxu0
  %v103 = vpop.f32.mrb[0].mxu0
  %v104 = vpop.f32.mrb[0].mxu0
  %105 = vdwg.mxu0
  %v106 = vmul.f32 %v58, 0.125
  %v107 = vmul.f32 %v101, 0.125
  %v108 = vld [vmem:[%s1] sm:$0xf]
  %v109 = vld [vmem:[%s1 + $0x4] sm:$0xf]
  %v111 = vsel %vm19, %v108, 0
  %113 = vmatprep.subr.bf16.mxu0 0
  %114 = vmatpush1.bf16.msra.mxu0 %v111
  %115 = vmatprep.subr.bf16.mxu0 0
  %116 = vmatpush1.bf16.msra.mxu0 0
  %117 = vmatprep.subr.bf16.mxu0 0
  %118 = vmatpush1.bf16.msra.mxu0 0
  %119 = vmatprep.subr.bf16.mxu0 0
  %120 = vmatpush1.bf16.msra.mxu0 0
  %121 = vmatprep.subr.bf16.mxu0 0
  %122 = vmatpush1.bf16.msra.mxu0 0
  %123 = vmatprep.subr.bf16.mxu0 0
  %124 = vmatpush1.bf16.msra.mxu0 0
  %125 = vmatprep.subr.bf16.mxu0 0
  %126 = vmatpush1.bf16.msra.mxu0 0
  %127 = vmatprep.subr.bf16.mxu0 0
  %128 = vmatpush1.bf16.msra.mxu0 0
  %129 = vmatprep.subr.bf16.mxu0 0
  %130 = vmatpush1.bf16.msra.mxu0 0
  %131 = vmatprep.subr.bf16.mxu0 0
  %132 = vmatpush1.bf16.msra.mxu0 0
  %133 = vmatprep.subr.bf16.mxu0 0
  %134 = vmatpush1.bf16.msra.mxu0 0
  %135 = vmatprep.subr.bf16.mxu0 0
  %136 = vmatpush1.bf16.msra.mxu0 0
  %137 = vmatprep.subr.bf16.mxu0 0
  %138 = vmatpush1.bf16.msra.mxu0 0
  %139 = vmatprep.subr.bf16.mxu0 0
  %140 = vmatpush1.bf16.msra.mxu0 0
  %141 = vmatprep.subr.bf16.mxu0 0
  %142 = vmatpush1.bf16.msra.mxu0 0
  %143 = vmatprep.subr.bf16.mxu0 0
  %144 = vmatpush1.bf16.msra.mxu0 0
  %145 = vmatprep.mubr.bf16.mxu0 0
  %146 = vmatmul.mubr.bf16.gmra.mrb[0].mxu0 %v17
  %v147 = vpop.f32.mrb[0].mxu0
  %v148 = vadd.f32 0.0, %v147
  %v149 = vpop.f32.mrb[0].mxu0
  %v150 = vpop.f32.mrb[0].mxu0
  %v151 = vpop.f32.mrb[0].mxu0
  %152 = vdwg.mxu0
  %v154 = vsel %vm19, %v109, 0
  %156 = vmatprep.subr.bf16.mxu0 0
  %157 = vmatpush1.bf16.msra.mxu0 %v154
  %158 = vmatprep.subr.bf16.mxu0 0
  %159 = vmatpush1.bf16.msra.mxu0 0
  %160 = vmatprep.subr.bf16.mxu0 0
  %161 = vmatpush1.bf16.msra.mxu0 0
  %162 = vmatprep.subr.bf16.mxu0 0
  %163 = vmatpush1.bf16.msra.mxu0 0
  %164 = vmatprep.subr.bf16.mxu0 0
  %165 = vmatpush1.bf16.msra.mxu0 0
  %166 = vmatprep.subr.bf16.mxu0 0
  %167 = vmatpush1.bf16.msra.mxu0 0
  %168 = vmatprep.subr.bf16.mxu0 0
  %169 = vmatpush1.bf16.msra.mxu0 0
  %170 = vmatprep.subr.bf16.mxu0 0
  %171 = vmatpush1.bf16.msra.mxu0 0
  %172 = vmatprep.subr.bf16.mxu0 0
  %173 = vmatpush1.bf16.msra.mxu0 0
  %174 = vmatprep.subr.bf16.mxu0 0
  %175 = vmatpush1.bf16.msra.mxu0 0
  %176 = vmatprep.subr.bf16.mxu0 0
  %177 = vmatpush1.bf16.msra.mxu0 0
  %178 = vmatprep.subr.bf16.mxu0 0
  %179 = vmatpush1.bf16.msra.mxu0 0
  %180 = vmatprep.subr.bf16.mxu0 0
  %181 = vmatpush1.bf16.msra.mxu0 0
  %182 = vmatprep.subr.bf16.mxu0 0
  %183 = vmatpush1.bf16.msra.mxu0 0
  %184 = vmatprep.subr.bf16.mxu0 0
  %185 = vmatpush1.bf16.msra.mxu0 0
  %186 = vmatprep.subr.bf16.mxu0 0
  %187 = vmatpush1.bf16.msra.mxu0 0
  %188 = vmatprep.mubr.bf16.mxu0 0
  %189 = vmatmul.mubr.bf16.gmra.mrb[0].mxu0 %v17
  %v190 = vpop.f32.mrb[0].mxu0
  %v191 = vadd.f32 0.0, %v190
  %v192 = vpop.f32.mrb[0].mxu0
  %v193 = vpop.f32.mrb[0].mxu0
  %v194 = vpop.f32.mrb[0].mxu0
  %195 = vdwg.mxu0
  %v196 = vmul.f32 %v148, 0.125
  %v197 = vmul.f32 %v191, 0.125
  %v198 = vmul.f32 %v106, %v106
  %v199 = vmul.f32 %v107, %v107
  %vm200 = vcmask 253952
  %v201 = vsel %vm200, %v198, 0.0
  %202 = vadd.xlane.f32.xlu0 %v201
  %v203 = vpop.xlane.xlu0 %202
  %v204 = vsel %vm200, %v199, 0.0
  %205 = vadd.xlane.f32.xlu0 %v204
  %v206 = vpop.xlane.xlu0 %205
  %v207 = vrsqrt.pop %v203
  %v208 = vmul.f32 %v203, %v207
  %vm209 = vcmp.eq.f32.partialorder %v203, inf
  %v210 = vsel %vm209, %v203, %v208
  %vm211 = vcmp.eq.f32.partialorder %v203, 0.0
  %v212 = vand.u32 %v203, 2147483648
  %v213 = vsel %vm211, %v212, %v210
  %v214 = vrsqrt.pop %v206
  %v215 = vmul.f32 %v206, %v214
  %vm216 = vcmp.eq.f32.partialorder %v206, inf
  %v217 = vsel %vm216, %v206, %v215
  %vm218 = vcmp.eq.f32.partialorder %v206, 0.0
  %v219 = vand.u32 %v206, 2147483648
  %v220 = vsel %vm218, %v219, %v217
  %v221 = vmul.f32 %v196, %v196
  %v222 = vmul.f32 %v197, %v197
  %v223 = vsel %vm200, %v221, 0.0
  %224 = vadd.xlane.f32.xlu0 %v223
  %v225 = vpop.xlane.xlu0 %224
  %v226 = vsel %vm200, %v222, 0.0
  %227 = vadd.xlane.f32.xlu0 %v226
  %v228 = vpop.xlane.xlu0 %227
  %v229 = vrsqrt.pop %v225
  %v230 = vmul.f32 %v225, %v229
  %vm231 = vcmp.eq.f32.partialorder %v225, inf
  %v232 = vsel %vm231, %v225, %v230
  %vm233 = vcmp.eq.f32.partialorder %v225, 0.0
  %v234 = vand.u32 %v225, 2147483648
  %v235 = vsel %vm233, %v234, %v232
  %v236 = vrsqrt.pop %v228
  %v237 = vmul.f32 %v228, %v236
  %vm238 = vcmp.eq.f32.partialorder %v228, inf
  %v239 = vsel %vm238, %v228, %v237
  %vm240 = vcmp.eq.f32.partialorder %v228, 0.0
  %v241 = vand.u32 %v228, 2147483648
  %v242 = vsel %vm240, %v241, %v239
  %v243 = vsub.f32 100.0, %v235
  %v244 = vsub.f32 100.0, %v242
  %v245 = vand.u32 2147483647, %v243
  %v246 = vand.u32 2147483647, %v244
  %v247 = vadd.f32 %v245, %v213
  %v248 = vadd.f32 %v246, %v220
  %v249 = vmul.f32 %v247, %v247
  %v250 = vmul.f32 %v248, %v248
  %v251 = vlaneseq
  %v252 = vshrl.u32 %v251, 7
  %s253 = smul.u32 0, 2
  %v254 = vstv %s253
  %v255 = vadd.s32 %v254, %v252
  %vm256 = vcmp.lt.s32.totalorder %v255, 2
  %v259 = vrot.slane %v250, 7
  %vm260 = vcmask 1041409
  %v261 = vsel %vm260, %v259, %v249
  %v263 = vsel %vm256, %v261, 0.0
  %vm264 = vcmask 1024
  %v265 = vsel %vm264, %v263, 0.0
  %266 = vadd.xlane.f32.xlu0 %v265
  %v267 = vpop.xlane.xlu0 %266
  %v268 = vrot.slane %v267, 4
  %v269 = vadd.f32 %v267, %v268
  %v270 = vrot.slane %v269, 2
  %v271 = vadd.f32 %v269, %v270
  %v272 = vrot.slane %v271, 1
  %v273 = vadd.f32 %v271, %v272
  %s274 = vtos %v273
  %v275 = vstv %s274
  %v276 = vadd.f32 %v275, 0.0
  %277 = vst [vmem:[%s2] sm:$0xff] %v276
  // Predicated region
  $region10: #{rtfm_loss.1} parent=0 // pred_check
    _
  $region11: #{rtfm_loss.1} parent=0 // pred_check_branch
    %279 = sbr.rel (0) target = $region13
  $region12: #{rtfm_loss.1} parent=0 // pred_region
    _
  $region13: #{rtfm_loss.1} parent=0 // pred_fallthru
    _
  // Predicated region
  $region14: #{rtfm_loss.1} parent=0 // pred_check
    _
  $region15: #{rtfm_loss.1} parent=0 // pred_check_branch
    %281 = sbr.rel (0) target = $region17
  $region16: #{rtfm_loss.1} parent=0 // pred_region
    _
  $region17: #{rtfm_loss.1} parent=0 // pred_fallthru
    _

</llo_original>
